<compile_context>
chip_gen: v6e
topology: v6e:2x2x1
jax: 0.10.0
libtpu: 0.0.40
codegen_flags: <defaults>
</compile_context>

<pallas_src>
import functools

import jax
import jax.numpy as jnp
from jax import lax
from jax.experimental import pallas as pl
from jax.experimental.pallas import tpu as pltpu

_CHUNK = 256  # batch columns (lanes) per in-register sub-chunk inside a tile


def _round_up(a, m):
    return ((a + m - 1) // m) * m


def _pick_tile(n, tm):
    """Batch tile: full extent for small N, else a multiple of _CHUNK capped at
    ceil(N/2) so a v7x chip's two TensorCores both get grid steps."""
    if n <= _CHUNK:
        return n
    half = _round_up(pl.cdiv(n, 2), _CHUNK)
    return max(_CHUNK, _round_up(min(tm, half), _CHUNK))


def _mlp_kernel(*refs, n_hidden_layers, chunk, bf16_tanh):
    # refs = (xt, w1t, b1t, ..., wLt, bLt, wot, ot)
    xt_ref = refs[0]
    ot_ref = refs[-1]
    hidden_refs = refs[1:1 + 2 * n_hidden_layers]
    wot_ref = refs[1 + 2 * n_hidden_layers]

    n_in, tm = xt_ref.shape
    nchunks = tm // chunk

    # Weights/biases are tiny; load once per grid step and keep them live.
    hidden = [(hidden_refs[2 * l][...], hidden_refs[2 * l + 1][...])
              for l in range(n_hidden_layers)]           # (H_out,H_in),(H_out,1)
    wot = wot_ref[...]                                    # (n_out, H_last)

    act_dtype = jnp.bfloat16 if bf16_tanh else jnp.float32

    def act(z):
        # tanh is the saturating (EUP) op; optionally run it in bf16 on
        # v6e/v7x where the EUP has a bf16 path.
        return jnp.tanh(z.astype(act_dtype)).astype(jnp.float32)

    def one_chunk(c0):
        xs = xt_ref[:, pl.ds(c0, chunk)]                  # (n_in, chunk)
        w1t, b1t = hidden[0]
        if n_in <= 4:
            # Layer 1: K = n_input is tiny -> VPU outer-product FMAs instead
            # of wasting an MXU push/pop on a 2-deep contraction.
            h = b1t + w1t[:, 0:1] * xs[0:1, :]
            for k in range(1, n_in):
                h = h + w1t[:, k:k + 1] * xs[k:k + 1, :]
        else:
            h = jnp.dot(w1t, xs, preferred_element_type=jnp.float32) + b1t
        h = act(h)
        for l in range(1, n_hidden_layers):
            wt, bt = hidden[l]
            h = act(jnp.dot(wt, h, preferred_element_type=jnp.float32) + bt)
        out = jnp.dot(wot, h, preferred_element_type=jnp.float32)  # (n_out, chunk)
        # Lane-dense store: chunk is along lanes -> unmasked vst.
        ot_ref[:, pl.ds(c0, chunk)] = out.astype(ot_ref.dtype)

    if nchunks == 1:
        one_chunk(0)
    else:
        # Unrolled fori_loop bounds the live ranges of the (H, chunk)
        # intermediates so they stay in vregs instead of spilling to VMEM.
        def body(c, carry):
            one_chunk(pl.multiple_of(c * chunk, chunk))
            return carry

        lax.fori_loop(0, nchunks, body, 0, unroll=True)


@functools.partial(jax.jit, static_argnames=("tm", "bf16_tanh"))
def deepnet_forward(x, params, *, tm=2048, bf16_tanh=False):
    """DeepNet forward.

    x:      (N, n_input) float32 (1-D inputs are unsqueezed, as in the module)
    params: {"hidden": ((w, b), ...) with w (in, out), b (1, out),
             "out_w": (in, n_out)}   -- output layer has no bias.
    """
    if x.ndim == 1:
        x = x[:, None]                        # DeepNet.forward unsqueeze(-1)
    n, n_in = x.shape

    hidden = params["hidden"]
    n_layers = len(hidden)
    wo = params["out_w"]
    n_out = wo.shape[1]

    # Feature-major (PyTorch-native) layouts for the kernel: batch along lanes.
    xt = x.T                                  # (n_in, N)
    hidden_t = []
    for (w, b) in hidden:
        hidden_t += [w.T, b.T]                # (out, in), (out, 1)
    wot = wo.T                                # (n_out, H_last)

    tm_eff = _pick_tile(n, tm)
    chunk = tm_eff if tm_eff <= _CHUNK else _CHUNK
    assert tm_eff % chunk == 0
    grid = (pl.cdiv(n, tm_eff),)
    # NOTE: if n % tm_eff != 0 the last tile reads past the end of xt into
    # block padding; the padded columns are computed and then discarded on
    # write-back (benign).

    dims = [n_in] + [w.shape[1] for (w, _) in hidden] + [n_out]
    cost = pl.CostEstimate(
        flops=2 * n * sum(dims[i] * dims[i + 1] for i in range(len(dims) - 1)),
        transcendentals=n * sum(dims[1:-1]),
        bytes_accessed=4 * (n * (n_in + n_out)
                            + sum(w.size + b.size for (w, b) in hidden)
                            + wo.size),
    )

    full = lambda a: pl.BlockSpec(a.shape, lambda i: (0, 0))
    in_specs = [pl.BlockSpec((n_in, tm_eff), lambda i: (0, i))]   # xt tile
    in_specs += [full(a) for a in hidden_t]
    in_specs += [full(wot)]

    kernel = functools.partial(_mlp_kernel, n_hidden_layers=n_layers,
                               chunk=chunk, bf16_tanh=bf16_tanh)

    ot = pl.pallas_call(
        kernel,
        out_shape=jax.ShapeDtypeStruct((n_out, n), jnp.float32),
        grid_spec=pltpu.PrefetchScalarGridSpec(
            num_scalar_prefetch=0,
            grid=grid,
            in_specs=in_specs,
            out_specs=pl.BlockSpec((n_out, tm_eff), lambda i: (0, i)),
        ),
        compiler_params=pltpu.CompilerParams(
            dimension_semantics=("parallel",)),
        cost_estimate=cost,
    )(xt, *hidden_t, wot)

    return ot.T                               # back to (N, n_out)


def _xavier_normal(key, fan_in, fan_out):
    std = (2.0 / (fan_in + fan_out)) ** 0.5
    # Stored (in, out); equivalent to PyTorch's (out, in) weight transposed.
    return std * jax.random.normal(key, (fan_in, fan_out), dtype=jnp.float32)


def init_params(key, n_input, n_hidden, n_output):
    keys = jax.random.split(key, len(n_hidden) + 1)
    layers = []
    fan_in = n_input
    for i, width in enumerate(n_hidden):
        layers.append((_xavier_normal(keys[i], fan_in, width),
                       jnp.zeros((1, width), jnp.float32)))
        fan_in = width
    return {"hidden": tuple(layers),
            "out_w": _xavier_normal(keys[-1], fan_in, n_output)}


def _reference(x, p):
    h = x
    for (w, b) in p["hidden"]:
        h = jnp.tanh(h @ w + b)
    return h @ p["out_w"]


if __name__ == "__main__":
    key = jax.random.PRNGKey(0)
    kx, kp = jax.random.split(key)

    n_input, n_hidden, n_output = 2, [32, 32, 32], 1
    params = init_params(kp, n_input, n_hidden, n_output)

    # Small batch: single full-extent tile (deliberately not a multiple of 128).
    x_small = jax.random.uniform(kx, (200, n_input), dtype=jnp.float32)
    out_small = jax.block_until_ready(deepnet_forward(x_small, params))
    assert out_small.shape == (200, n_output)
    assert jnp.allclose(out_small, _reference(x_small, params),
                        atol=1e-5, rtol=1e-4)

    # Larger batch: 2 grid steps x 8 unrolled 256-column chunks.
    x_big = jax.random.uniform(kx, (4096, n_input), dtype=jnp.float32)
    out_big = jax.block_until_ready(deepnet_forward(x_big, params))
    ref_big = _reference(x_big, params)
    assert out_big.shape == (4096, n_output)
    assert jnp.allclose(out_big, ref_big, atol=1e-5, rtol=1e-4)

    # Ragged batch: last tile is block-padded; padded columns are discarded.
    x_rag = jax.random.uniform(kx, (1000, n_input), dtype=jnp.float32)
    out_rag = jax.block_until_ready(deepnet_forward(x_rag, params))
    assert jnp.allclose(out_rag, _reference(x_rag, params),
                        atol=1e-5, rtol=1e-4)

    # Optional bf16-tanh path (v6e/v7x EUP speedup); looser tolerance since
    # the activation is evaluated in bf16.
    out_bf16 = jax.block_until_ready(
        deepnet_forward(x_big, params, bf16_tanh=True))
    assert jnp.allclose(out_bf16, ref_big, atol=1e-1)

    print("KERNEL_OK")
</pallas_src>

<mosaic_0001>
module attributes {stable_mosaic.version = 11 : i64} {
  func.func @_mlp_kernel(%arg0: i32, %arg1: memref<2x200xf32, #tpu.memory_space<vmem>>, %arg2: memref<32x2xf32, #tpu.memory_space<vmem>>, %arg3: memref<32x1xf32, #tpu.memory_space<vmem>>, %arg4: memref<32x32xf32, #tpu.memory_space<vmem>>, %arg5: memref<32x1xf32, #tpu.memory_space<vmem>>, %arg6: memref<32x32xf32, #tpu.memory_space<vmem>>, %arg7: memref<32x1xf32, #tpu.memory_space<vmem>>, %arg8: memref<1x32xf32, #tpu.memory_space<vmem>>, %arg9: memref<1x200xf32, #tpu.memory_space<vmem>>) attributes {dimension_semantics = [#tpu.dimension_semantics<parallel>], iteration_bounds = array<i64: 1>, scalar_prefetch = 0 : i64, scratch_operands = 0 : i64, tpu.core_type = #tpu.core_type<tc>, window_params = [{transform_indices = @transform_0, window_bounds = array<i64: 2, 200>}, {pipeline_mode = #tpu.pipeline_mode<synchronous>, transform_indices = @transform_1, window_bounds = array<i64: 32, 2>}, {pipeline_mode = #tpu.pipeline_mode<synchronous>, transform_indices = @transform_2, window_bounds = array<i64: 32, 1>}, {pipeline_mode = #tpu.pipeline_mode<synchronous>, transform_indices = @transform_3, window_bounds = array<i64: 32, 32>}, {pipeline_mode = #tpu.pipeline_mode<synchronous>, transform_indices = @transform_4, window_bounds = array<i64: 32, 1>}, {pipeline_mode = #tpu.pipeline_mode<synchronous>, transform_indices = @transform_5, window_bounds = array<i64: 32, 32>}, {pipeline_mode = #tpu.pipeline_mode<synchronous>, transform_indices = @transform_6, window_bounds = array<i64: 32, 1>}, {pipeline_mode = #tpu.pipeline_mode<synchronous>, transform_indices = @transform_7, window_bounds = array<i64: 1, 32>}, {transform_indices = @transform_8, window_bounds = array<i64: 1, 200>}]} {
    %c0 = arith.constant 0 : index
    %c0_0 = arith.constant 0 : index
    %0 = vector.load %arg2[%c0, %c0_0] : memref<32x2xf32, #tpu.memory_space<vmem>>, vector<32x2xf32>
    %c0_1 = arith.constant 0 : index
    %c0_2 = arith.constant 0 : index
    %1 = vector.load %arg3[%c0_1, %c0_2] : memref<32x1xf32, #tpu.memory_space<vmem>>, vector<32x1xf32>
    %c0_3 = arith.constant 0 : index
    %c0_4 = arith.constant 0 : index
    %2 = vector.load %arg4[%c0_3, %c0_4] : memref<32x32xf32, #tpu.memory_space<vmem>>, vector<32x32xf32>
    %c0_5 = arith.constant 0 : index
    %c0_6 = arith.constant 0 : index
    %3 = vector.load %arg5[%c0_5, %c0_6] : memref<32x1xf32, #tpu.memory_space<vmem>>, vector<32x1xf32>
    %c0_7 = arith.constant 0 : index
    %c0_8 = arith.constant 0 : index
    %4 = vector.load %arg6[%c0_7, %c0_8] : memref<32x32xf32, #tpu.memory_space<vmem>>, vector<32x32xf32>
    %c0_9 = arith.constant 0 : index
    %c0_10 = arith.constant 0 : index
    %5 = vector.load %arg7[%c0_9, %c0_10] : memref<32x1xf32, #tpu.memory_space<vmem>>, vector<32x1xf32>
    %c0_11 = arith.constant 0 : index
    %c0_12 = arith.constant 0 : index
    %6 = vector.load %arg8[%c0_11, %c0_12] : memref<1x32xf32, #tpu.memory_space<vmem>>, vector<1x32xf32>
    %c0_13 = arith.constant 0 : index
    %c0_14 = arith.constant 0 : index
    %7 = vector.load %arg1[%c0_13, %c0_14] : memref<2x200xf32, #tpu.memory_space<vmem>>, vector<2x200xf32>
    %8 = vector.extract_strided_slice %0 {offsets = [0, 0], sizes = [32, 1], strides = [1, 1]} : vector<32x2xf32> to vector<32x1xf32>
    %9 = vector.extract_strided_slice %7 {offsets = [0, 0], sizes = [1, 200], strides = [1, 1]} : vector<2x200xf32> to vector<1x200xf32>
    %10 = vector.broadcast %8 : vector<32x1xf32> to vector<32x200xf32>
    %11 = vector.broadcast %9 : vector<1x200xf32> to vector<32x200xf32>
    %12 = arith.mulf %10, %11 : vector<32x200xf32>
    %13 = vector.broadcast %1 : vector<32x1xf32> to vector<32x200xf32>
    %14 = arith.addf %13, %12 : vector<32x200xf32>
    %15 = vector.extract_strided_slice %0 {offsets = [0, 1], sizes = [32, 1], strides = [1, 1]} : vector<32x2xf32> to vector<32x1xf32>
    %16 = vector.extract_strided_slice %7 {offsets = [1, 0], sizes = [1, 200], strides = [1, 1]} : vector<2x200xf32> to vector<1x200xf32>
    %17 = vector.broadcast %15 : vector<32x1xf32> to vector<32x200xf32>
    %18 = vector.broadcast %16 : vector<1x200xf32> to vector<32x200xf32>
    %19 = arith.mulf %17, %18 : vector<32x200xf32>
    %20 = arith.addf %14, %19 : vector<32x200xf32>
    %21 = math.tanh %20 : vector<32x200xf32>
    %cst = arith.constant dense<0.000000e+00> : vector<32x200xf32>
    %22 = tpu.matmul %2, %21, %cst {dimension_numbers = #tpu.dot_dimension_numbers<[1], [0], [0], [1], [0, 0, 1, 1], [], []>} : vector<32x32xf32>, vector<32x200xf32>, vector<32x200xf32> -> vector<32x200xf32>
    %23 = vector.broadcast %3 : vector<32x1xf32> to vector<32x200xf32>
    %24 = arith.addf %22, %23 : vector<32x200xf32>
    %25 = math.tanh %24 : vector<32x200xf32>
    %cst_15 = arith.constant dense<0.000000e+00> : vector<32x200xf32>
    %26 = tpu.matmul %4, %25, %cst_15 {dimension_numbers = #tpu.dot_dimension_numbers<[1], [0], [0], [1], [0, 0, 1, 1], [], []>} : vector<32x32xf32>, vector<32x200xf32>, vector<32x200xf32> -> vector<32x200xf32>
    %27 = vector.broadcast %5 : vector<32x1xf32> to vector<32x200xf32>
    %28 = arith.addf %26, %27 : vector<32x200xf32>
    %29 = math.tanh %28 : vector<32x200xf32>
    %cst_16 = arith.constant dense<0.000000e+00> : vector<1x200xf32>
    %30 = tpu.matmul %6, %29, %cst_16 {dimension_numbers = #tpu.dot_dimension_numbers<[1], [0], [0], [1], [0, 0, 1, 1], [], []>} : vector<1x32xf32>, vector<32x200xf32>, vector<1x200xf32> -> vector<1x200xf32>
    %c0_17 = arith.constant 0 : index
    %c0_18 = arith.constant 0 : index
    %31 = vector.load %arg9[%c0_17, %c0_18] : memref<1x200xf32, #tpu.memory_space<vmem>>, vector<1x200xf32>
    tpu.vector_store %arg9[%c0_17, %c0_18], %30 {strides = array<i32>} : memref<1x200xf32, #tpu.memory_space<vmem>>, vector<1x200xf32>,
    return
  }
  func.func @transform_0(%arg0: i32) -> (i32, i32) {
    %c0_i32 = arith.constant 0 : i32
    %c0_i32_0 = arith.constant 0 : i32
    return %c0_i32, %arg0 : i32, i32
  }
  func.func @transform_1(%arg0: i32) -> (i32, i32) {
    %c0_i32 = arith.constant 0 : i32
    %c0_i32_0 = arith.constant 0 : i32
    %c0_i32_1 = arith.constant 0 : i32
    return %c0_i32, %c0_i32_0 : i32, i32
  }
  func.func @transform_2(%arg0: i32) -> (i32, i32) {
    %c0_i32 = arith.constant 0 : i32
    %c0_i32_0 = arith.constant 0 : i32
    %c0_i32_1 = arith.constant 0 : i32
    return %c0_i32, %c0_i32_0 : i32, i32
  }
  func.func @transform_3(%arg0: i32) -> (i32, i32) {
    %c0_i32 = arith.constant 0 : i32
    %c0_i32_0 = arith.constant 0 : i32
    %c0_i32_1 = arith.constant 0 : i32
    return %c0_i32, %c0_i32_0 : i32, i32
  }
  func.func @transform_4(%arg0: i32) -> (i32, i32) {
    %c0_i32 = arith.constant 0 : i32
    %c0_i32_0 = arith.constant 0 : i32
    %c0_i32_1 = arith.constant 0 : i32
    return %c0_i32, %c0_i32_0 : i32, i32
  }
  func.func @transform_5(%arg0: i32) -> (i32, i32) {
    %c0_i32 = arith.constant 0 : i32
    %c0_i32_0 = arith.constant 0 : i32
    %c0_i32_1 = arith.constant 0 : i32
    return %c0_i32, %c0_i32_0 : i32, i32
  }
  func.func @transform_6(%arg0: i32) -> (i32, i32) {
    %c0_i32 = arith.constant 0 : i32
    %c0_i32_0 = arith.constant 0 : i32
    %c0_i32_1 = arith.constant 0 : i32
    return %c0_i32, %c0_i32_0 : i32, i32
  }
  func.func @transform_7(%arg0: i32) -> (i32, i32) {
    %c0_i32 = arith.constant 0 : i32
    %c0_i32_0 = arith.constant 0 : i32
    %c0_i32_1 = arith.constant 0 : i32
    return %c0_i32, %c0_i32_0 : i32, i32
  }
  func.func @transform_8(%arg0: i32) -> (i32, i32) {
    %c0_i32 = arith.constant 0 : i32
    %c0_i32_0 = arith.constant 0 : i32
    return %c0_i32, %arg0 : i32, i32
  }
}

</mosaic_0001>

<llo_original>
// kernel: deepnet_forward.1
$region0: #{deepnet_forward.1}
  #allocation0 [shape = 'u32[]', space=smem, size = 0x4, offset = 0x4, fixed_abs, tag = 'smem constant byte address 0x4 - core index']
  #allocation1 [shape = 'u32[144,128]{1,0:T(1,128)}', space=vmem, size = 0x12000, scoped, tag = 'internal scratch']
  %s0 = inlined_call_operand.vmem [shape: f32[2,200], index: 0, kind: input, shape index: {}]
  %s1 = inlined_call_operand.vmem [shape: f32[32,2], index: 1, kind: input, shape index: {}]
  %s2 = inlined_call_operand.vmem [shape: f32[32,1], index: 2, kind: input, shape index: {}]
  %s3 = inlined_call_operand.vmem [shape: f32[32,32], index: 3, kind: input, shape index: {}]
  %s4 = inlined_call_operand.vmem [shape: f32[32,1], index: 4, kind: input, shape index: {}]
  %s5 = inlined_call_operand.vmem [shape: f32[32,32], index: 5, kind: input, shape index: {}]
  %s6 = inlined_call_operand.vmem [shape: f32[32,1], index: 6, kind: input, shape index: {}]
  %s7 = inlined_call_operand.vmem [shape: f32[1,32], index: 7, kind: input, shape index: {}]
  %s8 = inlined_call_operand.hbm [shape: f32[1,200], index: 8, kind: output, shape index: {}]
  %s9 = sld [smem:[#allocation0]]
  $region42: #{deepnet_forward.1} parent=0
    _
  %s11 = ssub.s32 1, %s9
  %s12 = scalar_select 0, %s11, %s9
  $region1: #{deepnet_forward.1} parent=0
    #allocation2 [shape = 'u8[1024]{0}', space=vmem, size = 0x400, scoped, tag = 'output window, operand 0, single buffered']
    #allocation3 [shape = 's32[1]{0}', space=sflag, size = 0x4, scoped, tag = 'scoped memory for deepnet_forward.1']
    %13 = vsyncpa [#allocation3], 0
    // Predicated region
    $region2: #{deepnet_forward.1} parent=1 // pred_check
      _
    $region3: #{deepnet_forward.1} parent=1 // pred_check_branch
      %15 = sbr.rel (0) target = $region5
    $region4: #{deepnet_forward.1} parent=1 // pred_region
      _
    $region5: #{deepnet_forward.1} parent=1 // pred_fallthru
      _
    // Predicated region
    $region6: #{deepnet_forward.1} parent=1 // pred_check
      _
    $region7: #{deepnet_forward.1} parent=1 // pred_check_branch
      %17 = sbr.rel (0) target = $region9
    $region8: #{deepnet_forward.1} parent=1 // pred_region
      _
    $region9: #{deepnet_forward.1} parent=1 // pred_fallthru
      _
    // Predicated region
    $region10: #{deepnet_forward.1} parent=1 // pred_check
      _
    $region11: #{deepnet_forward.1} parent=1 // pred_check_branch
      %19 = sbr.rel (0) target = $region13
    $region12: #{deepnet_forward.1} parent=1 // pred_region
      _
    $region13: #{deepnet_forward.1} parent=1 // pred_fallthru
      _
    // Predicated region
    $region14: #{deepnet_forward.1} parent=1 // pred_check
      _
    $region15: #{deepnet_forward.1} parent=1 // pred_check_branch
      %21 = sbr.rel (0) target = $region17
    $region16: #{deepnet_forward.1} parent=1 // pred_region
      _
    $region17: #{deepnet_forward.1} parent=1 // pred_fallthru
      _
    // Predicated region
    $region18: #{deepnet_forward.1} parent=1 // pred_check
      _
    $region19: #{deepnet_forward.1} parent=1 // pred_check_branch
      %23 = sbr.rel (0) target = $region21
    $region20: #{deepnet_forward.1} parent=1 // pred_region
      _
    $region21: #{deepnet_forward.1} parent=1 // pred_fallthru
      _
    // Predicated region
    $region22: #{deepnet_forward.1} parent=1 // pred_check
      _
    $region23: #{deepnet_forward.1} parent=1 // pred_check_branch
      %25 = sbr.rel (0) target = $region25
    $region24: #{deepnet_forward.1} parent=1 // pred_region
      _
    $region25: #{deepnet_forward.1} parent=1 // pred_fallthru
      _
    // Predicated region
    $region26: #{deepnet_forward.1} parent=1 // pred_check
      _
    $region27: #{deepnet_forward.1} parent=1 // pred_check_branch
      %27 = sbr.rel (0) target = $region29
    $region28: #{deepnet_forward.1} parent=1 // pred_region
      _
    $region29: #{deepnet_forward.1} parent=1 // pred_fallthru
      _
    // Predicated region
    $region30: #{deepnet_forward.1} parent=1 // pred_check
      _
    $region31: #{deepnet_forward.1} parent=1 // pred_check_branch
      %29 = sbr.rel (0) target = $region33
    $region32: #{deepnet_forward.1} parent=1 // pred_region
      _
    $region33: #{deepnet_forward.1} parent=1 // pred_fallthru
      _
    %v30 = vld [vmem:[%s1] sm:$0xff]
    %v31 = vld [vmem:[%s1 + $0x8] sm:$0xff]
    %v32 = vld [vmem:[%s1 + $0x10] sm:$0xff]
    %v33 = vld [vmem:[%s1 + $0x18] sm:$0xff]
    %v34 = vld [vmem:[%s2] sm:$0xff]
    %v35 = vld [vmem:[%s2 + $0x8] sm:$0xff]
    %v36 = vld [vmem:[%s2 + $0x10] sm:$0xff]
    %v37 = vld [vmem:[%s2 + $0x18] sm:$0xff]
    %v38 = vld [vmem:[%s3] sm:$0xff]
    %v39 = vld [vmem:[%s3 + $0x8] sm:$0xff]
    %v40 = vld [vmem:[%s3 + $0x10] sm:$0xff]
    %v41 = vld [vmem:[%s3 + $0x18] sm:$0xff]
    %v42 = vld [vmem:[%s4] sm:$0xff]
    %v43 = vld [vmem:[%s4 + $0x8] sm:$0xff]
    %v44 = vld [vmem:[%s4 + $0x10] sm:$0xff]
    %v45 = vld [vmem:[%s4 + $0x18] sm:$0xff]
    %v46 = vld [vmem:[%s5] sm:$0xff]
    %v47 = vld [vmem:[%s5 + $0x8] sm:$0xff]
    %v48 = vld [vmem:[%s5 + $0x10] sm:$0xff]
    %v49 = vld [vmem:[%s5 + $0x18] sm:$0xff]
    %v50 = vld [vmem:[%s6] sm:$0xff]
    %v51 = vld [vmem:[%s6 + $0x8] sm:$0xff]
    %v52 = vld [vmem:[%s6 + $0x10] sm:$0xff]
    %v53 = vld [vmem:[%s6 + $0x18] sm:$0xff]
    %v54 = vld [vmem:[%s7] sm:$0x1]
    %v55 = vld [vmem:[%s0] sm:$0xf]
    %57 = vset.pattern.permute.xlu0 0
    %58 = vperm.xlu0 %57, %v30
    %v59 = vpop.permute.xlu0 %58
    %62 = vset.pattern.permute.xlu0 0
    %63 = vperm.xlu0 %62, %v31
    %v64 = vpop.permute.xlu0 %63
    %67 = vset.pattern.permute.xlu0 0
    %68 = vperm.xlu0 %67, %v32
    %v69 = vpop.permute.xlu0 %68
    %72 = vset.pattern.permute.xlu0 0
    %73 = vperm.xlu0 %72, %v33
    %v74 = vpop.permute.xlu0 %73
    %v77 = vlaneseq
    %v78 = vshrl.u32 %v77, 7
    %v79 = vsub.s32 0, %v78
    %v80 = vrot.slane %v55, %v79
    %v81 = vlaneseq
    %v82 = vshrl.u32 %v81, 7
    %v83 = vsub.s32 2, %v82
    %v84 = vrot.slane %v55, %v83
    %v87 = vlaneseq
    %v88 = vshrl.u32 %v87, 7
    %v89 = vsub.s32 0, %v88
    %v90 = vrot.slane %v80, %v89
    %v91 = vlaneseq
    %v92 = vshrl.u32 %v91, 7
    %v93 = vsub.s32 0, %v92
    %v94 = vrot.slane %v84, %v93
    %v95 = vmul.f32 %v59, %v90
    %v96 = vmul.f32 %v59, %v94
    %v97 = vmul.f32 %v64, %v90
    %v98 = vmul.f32 %v64, %v94
    %v99 = vmul.f32 %v69, %v90
    %v100 = vmul.f32 %v69, %v94
    %v101 = vmul.f32 %v74, %v90
    %v102 = vmul.f32 %v74, %v94
    %104 = vset.pattern.permute.xlu0 0
    %105 = vperm.xlu0 %104, %v34
    %v106 = vpop.permute.xlu0 %105
    %109 = vset.pattern.permute.xlu0 0
    %110 = vperm.xlu0 %109, %v35
    %v111 = vpop.permute.xlu0 %110
    %114 = vset.pattern.permute.xlu0 0
    %115 = vperm.xlu0 %114, %v36
    %v116 = vpop.permute.xlu0 %115
    %119 = vset.pattern.permute.xlu0 0
    %120 = vperm.xlu0 %119, %v37
    %v121 = vpop.permute.xlu0 %120
    %v123 = vadd.f32 %v106, %v95
    %v124 = vadd.f32 %v106, %v96
    %v125 = vadd.f32 %v111, %v97
    %v126 = vadd.f32 %v111, %v98
    %v127 = vadd.f32 %v116, %v99
    %v128 = vadd.f32 %v116, %v100
    %v129 = vadd.f32 %v121, %v101
    %v130 = vadd.f32 %v121, %v102
    %131 = vset.pattern.permute.xlu0 1
    %132 = vperm.xlu0 %131, %v30
    %v133 = vpop.permute.xlu0 %132
    %135 = vset.pattern.permute.xlu0 1
    %136 = vperm.xlu0 %135, %v31
    %v137 = vpop.permute.xlu0 %136
    %139 = vset.pattern.permute.xlu0 1
    %140 = vperm.xlu0 %139, %v32
    %v141 = vpop.permute.xlu0 %140
    %143 = vset.pattern.permute.xlu0 1
    %144 = vperm.xlu0 %143, %v33
    %v145 = vpop.permute.xlu0 %144
    %v147 = vlaneseq
    %v148 = vshrl.u32 %v147, 7
    %v149 = vsub.s32 1, %v148
    %v150 = vrot.slane %v55, %v149
    %v151 = vlaneseq
    %v152 = vshrl.u32 %v151, 7
    %v153 = vsub.s32 3, %v152
    %v154 = vrot.slane %v55, %v153
    %v157 = vlaneseq
    %v158 = vshrl.u32 %v157, 7
    %v159 = vsub.s32 1, %v158
    %v160 = vrot.slane %v150, %v159
    %v161 = vlaneseq
    %v162 = vshrl.u32 %v161, 7
    %v163 = vsub.s32 1, %v162
    %v164 = vrot.slane %v154, %v163
    %v165 = vmul.f32 %v133, %v160
    %v166 = vmul.f32 %v133, %v164
    %v167 = vmul.f32 %v137, %v160
    %v168 = vmul.f32 %v137, %v164
    %v169 = vmul.f32 %v141, %v160
    %v170 = vmul.f32 %v141, %v164
    %v171 = vmul.f32 %v145, %v160
    %v172 = vmul.f32 %v145, %v164
    %v173 = vadd.f32 %v123, %v165
    %v174 = vadd.f32 %v124, %v166
    %v175 = vadd.f32 %v125, %v167
    %v176 = vadd.f32 %v126, %v168
    %v177 = vadd.f32 %v127, %v169
    %v178 = vadd.f32 %v128, %v170
    %v179 = vadd.f32 %v129, %v171
    %v180 = vadd.f32 %v130, %v172
    %v181 = vtanh.pop %v173
    %v182 = vtanh.pop %v174
    %v183 = vtanh.pop %v175
    %v184 = vtanh.pop %v176
    %v185 = vtanh.pop %v177
    %v186 = vtanh.pop %v178
    %v187 = vtanh.pop %v179
    %v188 = vtanh.pop %v180
    %190 = vset.pattern.permute.xlu0 0
    %191 = vperm.xlu0 %190, %v42
    %v192 = vpop.permute.xlu0 %191
    %195 = vset.pattern.permute.xlu0 0
    %196 = vperm.xlu0 %195, %v43
    %v197 = vpop.permute.xlu0 %196
    %200 = vset.pattern.permute.xlu0 0
    %201 = vperm.xlu0 %200, %v44
    %v202 = vpop.permute.xlu0 %201
    %205 = vset.pattern.permute.xlu0 0
    %206 = vperm.xlu0 %205, %v45
    %v207 = vpop.permute.xlu0 %206
    %vm209 = vcmask 261120
    %v211 = vsel %vm209, %v38, 0
    %v214 = vsel %vm209, %v39, 0
    %v217 = vsel %vm209, %v40, 0
    %v220 = vsel %vm209, %v41, 0
    %222 = vmatprep.subr.mxu0 0.0
    %223 = vmatpush1.msra.mxu0 0.0
    %224 = vmatprep.subr.mxu0 0.0
    %225 = vmatpush1.msra.mxu0 0.0
    %226 = vmatprep.subr.mxu0 0.0
    %227 = vmatpush1.msra.mxu0 0.0
    %228 = vmatprep.subr.mxu0 0.0
    %229 = vmatpush1.msra.mxu0 0.0
    %230 = vmatprep.subr.mxu0 0.0
    %231 = vmatpush1.msra.mxu0 0.0
    %232 = vmatprep.subr.mxu0 0.0
    %233 = vmatpush1.msra.mxu0 0.0
    %234 = vmatprep.subr.mxu0 0.0
    %235 = vmatpush1.msra.mxu0 0.0
    %236 = vmatprep.subr.mxu0 0.0
    %237 = vmatpush1.msra.mxu0 0.0
    %238 = vmatprep.subr.mxu0 0.0
    %239 = vmatpush1.msra.mxu0 0.0
    %240 = vmatprep.subr.mxu0 0.0
    %241 = vmatpush1.msra.mxu0 0.0
    %242 = vmatprep.subr.mxu0 0.0
    %243 = vmatpush1.msra.mxu0 0.0
    %244 = vmatprep.subr.mxu0 0.0
    %245 = vmatpush1.msra.mxu0 0.0
    %246 = vmatprep.subr.mxu0 %v188
    %247 = vmatpush1.msra.mxu0 %v187
    %248 = vmatprep.subr.mxu0 %v186
    %249 = vmatpush1.msra.mxu0 %v185
    %250 = vmatprep.subr.mxu0 %v184
    %251 = vmatpush1.msra.mxu0 %v183
    %252 = vmatprep.subr.mxu0 %v182
    %253 = vmatpush1.msra.mxu0 %v181
    %254 = vmatprep.subr.mxu0 0.0
    %255 = vmatpush2.msra.mxu0 0.0
    %256 = vmatprep.subr.mxu0 0.0
    %257 = vmatpush2.msra.mxu0 0.0
    %258 = vmatprep.subr.mxu0 0.0
    %259 = vmatpush2.msra.mxu0 0.0
    %260 = vmatprep.subr.mxu0 0.0
    %261 = vmatpush2.msra.mxu0 0.0
    %262 = vmatprep.subr.mxu0 0.0
    %263 = vmatpush2.msra.mxu0 0.0
    %264 = vmatprep.subr.mxu0 0.0
    %265 = vmatpush2.msra.mxu0 0.0
    %266 = vmatprep.subr.mxu0 0.0
    %267 = vmatpush2.msra.mxu0 0.0
    %268 = vmatprep.subr.mxu0 0.0
    %269 = vmatpush2.msra.mxu0 0.0
    %270 = vmatprep.subr.mxu0 0.0
    %271 = vmatpush2.msra.mxu0 0.0
    %272 = vmatprep.subr.mxu0 0.0
    %273 = vmatpush2.msra.mxu0 0.0
    %274 = vmatprep.subr.mxu0 0.0
    %275 = vmatpush2.msra.mxu0 0.0
    %276 = vmatprep.subr.mxu0 0.0
    %277 = vmatpush2.msra.mxu0 0.0
    %278 = vmatprep.subr.mxu0 0.0
    %279 = vmatpush2.msra.mxu0 0.0
    %280 = vmatprep.subr.mxu0 0.0
    %281 = vmatpush2.msra.mxu0 0.0
    %282 = vmatprep.subr.mxu0 0.0
    %283 = vmatpush2.msra.mxu0 0.0
    %284 = vmatprep.subr.mxu0 0.0
    %285 = vmatpush2.msra.mxu0 0.0
    %286 = vmatprep.mubr.f32.mxu0 0.0
    %287 = vmatmul.mubr.f32.gmra.mxu0 %v211
    %v288 = vpop.f32.mrf.mxu0
    %v289 = vadd.f32 %v192, %v288
    %v290 = vpop.f32.mrf.mxu0
    %v291 = vadd.f32 %v192, %v290
    %292 = vmatprep.mubr.f32.mxu0 0.0
    %293 = vmatmul.mubr.f32.gmra.mxu0 %v214
    %v294 = vpop.f32.mrf.mxu0
    %v295 = vadd.f32 %v197, %v294
    %v296 = vpop.f32.mrf.mxu0
    %v297 = vadd.f32 %v197, %v296
    %298 = vmatprep.mubr.f32.mxu0 0.0
    %299 = vmatmul.mubr.f32.gmra.mxu0 %v217
    %v300 = vpop.f32.mrf.mxu0
    %v301 = vadd.f32 %v202, %v300
    %v302 = vpop.f32.mrf.mxu0
    %v303 = vadd.f32 %v202, %v302
    %304 = vmatprep.mubr.f32.mxu0 0.0
    %305 = vmatmul.mubr.f32.gmra.mxu0 %v220
    %v306 = vpop.f32.mrf.mxu0
    %v307 = vadd.f32 %v207, %v306
    %v308 = vpop.f32.mrf.mxu0
    %v309 = vadd.f32 %v207, %v308
    %310 = vdwg.mxu0
    %v311 = vtanh.pop %v289
    %v312 = vtanh.pop %v291
    %v313 = vtanh.pop %v295
    %v314 = vtanh.pop %v297
    %v315 = vtanh.pop %v301
    %v316 = vtanh.pop %v303
    %v317 = vtanh.pop %v307
    %v318 = vtanh.pop %v309
    %320 = vset.pattern.permute.xlu0 0
    %321 = vperm.xlu0 %320, %v50
    %v322 = vpop.permute.xlu0 %321
    %325 = vset.pattern.permute.xlu0 0
    %326 = vperm.xlu0 %325, %v51
    %v327 = vpop.permute.xlu0 %326
    %330 = vset.pattern.permute.xlu0 0
    %331 = vperm.xlu0 %330, %v52
    %v332 = vpop.permute.xlu0 %331
    %335 = vset.pattern.permute.xlu0 0
    %336 = vperm.xlu0 %335, %v53
    %v337 = vpop.permute.xlu0 %336
    %v340 = vsel %vm209, %v46, 0
    %v343 = vsel %vm209, %v47, 0
    %v346 = vsel %vm209, %v48, 0
    %v349 = vsel %vm209, %v49, 0
    %351 = vmatprep.subr.mxu0 0.0
    %352 = vmatpush1.msra.mxu0 0.0
    %353 = vmatprep.subr.mxu0 0.0
    %354 = vmatpush1.msra.mxu0 0.0
    %355 = vmatprep.subr.mxu0 0.0
    %356 = vmatpush1.msra.mxu0 0.0
    %357 = vmatprep.subr.mxu0 0.0
    %358 = vmatpush1.msra.mxu0 0.0
    %359 = vmatprep.subr.mxu0 0.0
    %360 = vmatpush1.msra.mxu0 0.0
    %361 = vmatprep.subr.mxu0 0.0
    %362 = vmatpush1.msra.mxu0 0.0
    %363 = vmatprep.subr.mxu0 0.0
    %364 = vmatpush1.msra.mxu0 0.0
    %365 = vmatprep.subr.mxu0 0.0
    %366 = vmatpush1.msra.mxu0 0.0
    %367 = vmatprep.subr.mxu0 0.0
    %368 = vmatpush1.msra.mxu0 0.0
    %369 = vmatprep.subr.mxu0 0.0
    %370 = vmatpush1.msra.mxu0 0.0
    %371 = vmatprep.subr.mxu0 0.0
    %372 = vmatpush1.msra.mxu0 0.0
    %373 = vmatprep.subr.mxu0 0.0
    %374 = vmatpush1.msra.mxu0 0.0
    %375 = vmatprep.subr.mxu0 %v318
    %376 = vmatpush1.msra.mxu0 %v317
    %377 = vmatprep.subr.mxu0 %v316
    %378 = vmatpush1.msra.mxu0 %v315
    %379 = vmatprep.subr.mxu0 %v314
    %380 = vmatpush1.msra.mxu0 %v313
    %381 = vmatprep.subr.mxu0 %v312
    %382 = vmatpush1.msra.mxu0 %v311
    %383 = vmatprep.subr.mxu0 0.0
    %384 = vmatpush2.msra.mxu0 0.0
    %385 = vmatprep.subr.mxu0 0.0
    %386 = vmatpush2.msra.mxu0 0.0
    %387 = vmatprep.subr.mxu0 0.0
    %388 = vmatpush2.msra.mxu0 0.0
    %389 = vmatprep.subr.mxu0 0.0
    %390 = vmatpush2.msra.mxu0 0.0
    %391 = vmatprep.subr.mxu0 0.0
    %392 = vmatpush2.msra.mxu0 0.0
    %393 = vmatprep.subr.mxu0 0.0
    %394 = vmatpush2.msra.mxu0 0.0
    %395 = vmatprep.subr.mxu0 0.0
    %396 = vmatpush2.msra.mxu0 0.0
    %397 = vmatprep.subr.mxu0 0.0
    %398 = vmatpush2.msra.mxu0 0.0
    %399 = vmatprep.subr.mxu0 0.0
    %400 = vmatpush2.msra.mxu0 0.0
    %401 = vmatprep.subr.mxu0 0.0
    %402 = vmatpush2.msra.mxu0 0.0
    %403 = vmatprep.subr.mxu0 0.0
    %404 = vmatpush2.msra.mxu0 0.0
    %405 = vmatprep.subr.mxu0 0.0
    %406 = vmatpush2.msra.mxu0 0.0
    %407 = vmatprep.subr.mxu0 0.0
    %408 = vmatpush2.msra.mxu0 0.0
    %409 = vmatprep.subr.mxu0 0.0
    %410 = vmatpush2.msra.mxu0 0.0
    %411 = vmatprep.subr.mxu0 0.0
    %412 = vmatpush2.msra.mxu0 0.0
    %413 = vmatprep.subr.mxu0 0.0
    %414 = vmatpush2.msra.mxu0 0.0
    %415 = vmatprep.mubr.f32.mxu0 0.0
    %416 = vmatmul.mubr.f32.gmra.mxu0 %v340
    %v417 = vpop.f32.mrf.mxu0
    %v418 = vadd.f32 %v322, %v417
    %v419 = vpop.f32.mrf.mxu0
    %v420 = vadd.f32 %v322, %v419
    %421 = vmatprep.mubr.f32.mxu0 0.0
    %422 = vmatmul.mubr.f32.gmra.mxu0 %v343
    %v423 = vpop.f32.mrf.mxu0
    %v424 = vadd.f32 %v327, %v423
    %v425 = vpop.f32.mrf.mxu0
    %v426 = vadd.f32 %v327, %v425
    %427 = vmatprep.mubr.f32.mxu0 0.0
    %428 = vmatmul.mubr.f32.gmra.mxu0 %v346
    %v429 = vpop.f32.mrf.mxu0
    %v430 = vadd.f32 %v332, %v429
    %v431 = vpop.f32.mrf.mxu0
    %v432 = vadd.f32 %v332, %v431
    %433 = vmatprep.mubr.f32.mxu0 0.0
    %434 = vmatmul.mubr.f32.gmra.mxu0 %v349
    %v435 = vpop.f32.mrf.mxu0
    %v436 = vadd.f32 %v337, %v435
    %v437 = vpop.f32.mrf.mxu0
    %v438 = vadd.f32 %v337, %v437
    %439 = vdwg.mxu0
    %v440 = vtanh.pop %v418
    %v441 = vtanh.pop %v420
    %v442 = vtanh.pop %v424
    %v443 = vtanh.pop %v426
    %v444 = vtanh.pop %v430
    %v445 = vtanh.pop %v432
    %v446 = vtanh.pop %v436
    %v447 = vtanh.pop %v438
    %v449 = vsel %vm209, %v54, 0
    %451 = vmatprep.subr.mxu0 0.0
    %452 = vmatpush1.msra.mxu0 0.0
    %453 = vmatprep.subr.mxu0 0.0
    %454 = vmatpush1.msra.mxu0 0.0
    %455 = vmatprep.subr.mxu0 0.0
    %456 = vmatpush1.msra.mxu0 0.0
    %457 = vmatprep.subr.mxu0 0.0
    %458 = vmatpush1.msra.mxu0 0.0
    %459 = vmatprep.subr.mxu0 0.0
    %460 = vmatpush1.msra.mxu0 0.0
    %461 = vmatprep.subr.mxu0 0.0
    %462 = vmatpush1.msra.mxu0 0.0
    %463 = vmatprep.subr.mxu0 0.0
    %464 = vmatpush1.msra.mxu0 0.0
    %465 = vmatprep.subr.mxu0 0.0
    %466 = vmatpush1.msra.mxu0 0.0
    %467 = vmatprep.subr.mxu0 0.0
    %468 = vmatpush1.msra.mxu0 0.0
    %469 = vmatprep.subr.mxu0 0.0
    %470 = vmatpush1.msra.mxu0 0.0
    %471 = vmatprep.subr.mxu0 0.0
    %472 = vmatpush1.msra.mxu0 0.0
    %473 = vmatprep.subr.mxu0 0.0
    %474 = vmatpush1.msra.mxu0 0.0
    %475 = vmatprep.subr.mxu0 %v447
    %476 = vmatpush1.msra.mxu0 %v446
    %477 = vmatprep.subr.mxu0 %v445
    %478 = vmatpush1.msra.mxu0 %v444
    %479 = vmatprep.subr.mxu0 %v443
    %480 = vmatpush1.msra.mxu0 %v442
    %481 = vmatprep.subr.mxu0 %v441
    %482 = vmatpush1.msra.mxu0 %v440
    %483 = vmatprep.subr.mxu0 0.0
    %484 = vmatpush2.msra.mxu0 0.0
    %485 = vmatprep.subr.mxu0 0.0
    %486 = vmatpush2.msra.mxu0 0.0
    %487 = vmatprep.subr.mxu0 0.0
    %488 = vmatpush2.msra.mxu0 0.0
    %489 = vmatprep.subr.mxu0 0.0
    %490 = vmatpush2.msra.mxu0 0.0
    %491 = vmatprep.subr.mxu0 0.0
    %492 = vmatpush2.msra.mxu0 0.0
    %493 = vmatprep.subr.mxu0 0.0
    %494 = vmatpush2.msra.mxu0 0.0
    %495 = vmatprep.subr.mxu0 0.0
    %496 = vmatpush2.msra.mxu0 0.0
    %497 = vmatprep.subr.mxu0 0.0
    %498 = vmatpush2.msra.mxu0 0.0
    %499 = vmatprep.subr.mxu0 0.0
    %500 = vmatpush2.msra.mxu0 0.0
    %501 = vmatprep.subr.mxu0 0.0
    %502 = vmatpush2.msra.mxu0 0.0
    %503 = vmatprep.subr.mxu0 0.0
    %504 = vmatpush2.msra.mxu0 0.0
    %505 = vmatprep.subr.mxu0 0.0
    %506 = vmatpush2.msra.mxu0 0.0
    %507 = vmatprep.subr.mxu0 0.0
    %508 = vmatpush2.msra.mxu0 0.0
    %509 = vmatprep.subr.mxu0 0.0
    %510 = vmatpush2.msra.mxu0 0.0
    %511 = vmatprep.subr.mxu0 0.0
    %512 = vmatpush2.msra.mxu0 0.0
    %513 = vmatprep.subr.mxu0 0.0
    %514 = vmatpush2.msra.mxu0 0.0
    %515 = vmatprep.mubr.f32.mxu0 0.0
    %516 = vmatmul.mubr.f32.gmra.mxu0 %v449
    %v517 = vpop.f32.mrf.mxu0
    %v518 = vadd.f32 0.0, %v517
    %v519 = vpop.f32.mrf.mxu0
    %v520 = vadd.f32 0.0, %v519
    %521 = vdwg.mxu0
    %v524 = vcombine.low %v518, %v520
    %v526 = vunpack.c.l.s4 1966171168
    %v527 = vunpack.c.0.s8 %v526
    %v528 = vlaneseq
    %v529 = vshrl.u32 %v528, 7
    %v530 = vsub.s32 %v527, %v529
    %v531 = vrot.slane %v524, %v530
    %v533 = vunpack.c.l.s4 1966171168
    %v534 = vunpack.c.0.s8 %v533
    %v535 = vlaneseq
    %v536 = vshrl.u32 %v535, 7
    %v537 = vsub.s32 %v534, %v536
    %v538 = vrot.slane %v531, %v537
    %v540 = vlaneseq
    %vm541 = vcmp.ge.s32.totalorder %v540, 0
    %vm542 = vcmp.lt.s32.totalorder %v540, 200
    %vm543 = vmand %vm541, %vm542
    %544 = vst.msk [vmem:[#allocation2] sm:$0x3] %vm543, %v538
    // Predicated region
    $region34: #{deepnet_forward.1} parent=1 // pred_check
      _
    $region35: #{deepnet_forward.1} parent=1 // pred_check_branch
      %546 = sbr.rel (0) target = $region37
    $region36: #{deepnet_forward.1} parent=1 // pred_region
      %s548 = ssub.s32 32, 32
      %549 = vsyncadd [#allocation3], %s548
      %s551 = sshll.u32 [#allocation2], 4
      %s552 = int_to_ptr.vmem [resolvable:$true] %s551
      %554 = dma.vmem_to_hbm [thread:$0]  %s552, 32, %s8, [#allocation3]
    $region37: #{deepnet_forward.1} parent=1 // pred_fallthru
      _
    // Predicated region
    $region38: #{deepnet_forward.1} parent=1 // pred_check
      _
    $region39: #{deepnet_forward.1} parent=1 // pred_check_branch
      %556 = sbr.rel (0) target = $region41
    $region40: #{deepnet_forward.1} parent=1 // pred_region
      %557 = dma.done [#allocation3], 32
    $region41: #{deepnet_forward.1} parent=1 // pred_fallthru
      _
    %558 = vsyncpa [#allocation3], 1

</llo_original>
